<compile_context>
chip_gen: v7x
topology: tpu7x:2x2x1
jax: 0.10.0
libtpu: 0.0.40
codegen_flags: <defaults>
</compile_context>

<pallas_src>
import jax
import jax.numpy as jnp
from jax.experimental import pallas as pl
from jax.experimental.pallas import tpu as pltpu


def linear_kernel(x_ref, w_ref, b_ref, o_ref):
    # x_ref: VMEM (N, F_in); w_ref: SMEM (F_out, F_in); b_ref: SMEM (F_out,)
    # o_ref: VMEM (N, F_out)
    x = x_ref[...]
    n, f_in = x.shape
    f_out = o_ref.shape[-1]

    cols = []
    for j in range(f_out):                      # trace-time unrolled (tiny)
        acc = x[:, 0:1].astype(jnp.float32) * w_ref[j, 0]
        for k in range(1, f_in):
            acc = acc + x[:, k:k + 1].astype(jnp.float32) * w_ref[j, k]
        acc = acc + b_ref[j]
        cols.append(acc)
    y = cols[0] if f_out == 1 else jnp.concatenate(cols, axis=-1)
    o_ref[...] = y.astype(o_ref.dtype)


def linear_pallas(x, weight, bias):
    """x: [N, F_in], weight: [F_out, F_in], bias: [F_out] -> [N, F_out]."""
    n, f_in = x.shape
    f_out = weight.shape[0]
    return pl.pallas_call(
        linear_kernel,
        out_shape=jax.ShapeDtypeStruct((n, f_out), x.dtype),
        in_specs=[
            pl.BlockSpec(memory_space=pltpu.MemorySpace.VMEM),   # x (whole array)
            pl.BlockSpec(memory_space=pltpu.MemorySpace.SMEM),   # weight scalars
            pl.BlockSpec(memory_space=pltpu.MemorySpace.SMEM),   # bias scalar(s)
        ],
        out_specs=pl.BlockSpec(memory_space=pltpu.MemorySpace.VMEM),
    )(x, weight, bias)


if __name__ == "__main__":
    key = jax.random.PRNGKey(0)
    kx, kw, kb = jax.random.split(key, 3)

    # Model: nn.Linear(2, 1); init mirrors weight_bias_reset (normal mean=0, std=0.5).
    n, f_in, f_out = 8, 2, 1
    x = jax.random.normal(kx, (n, f_in), dtype=jnp.float32)
    weight = 0.5 * jax.random.normal(kw, (f_out, f_in), dtype=jnp.float32)
    bias = 0.5 * jax.random.normal(kb, (f_out,), dtype=jnp.float32)

    y = linear_pallas(x, weight, bias)
    jax.block_until_ready(y)

    # Reference check
    y_ref = x @ weight.T + bias
    assert y.shape == (n, f_out)
    assert jnp.allclose(y, y_ref, atol=1e-5), "mismatch vs reference"

    print("KERNEL_OK")
</pallas_src>

<mosaic_0001>
module attributes {stable_mosaic.version = 11 : i64} {
  func.func @linear_kernel(%arg0: memref<8x2xf32, #tpu.memory_space<vmem>>, %arg1: memref<1x2xf32, #tpu.memory_space<smem>>, %arg2: memref<1xf32, #tpu.memory_space<smem>>, %arg3: memref<8x1xf32, #tpu.memory_space<vmem>>) attributes {dimension_semantics = [], scalar_prefetch = 0 : i64, scratch_operands = 0 : i64, tpu.core_type = #tpu.core_type<tc>} {
    %c0 = arith.constant 0 : index
    %c0_0 = arith.constant 0 : index
    %0 = vector.load %arg0[%c0, %c0_0] : memref<8x2xf32, #tpu.memory_space<vmem>>, vector<8x2xf32>
    %1 = vector.extract_strided_slice %0 {offsets = [0, 0], sizes = [8, 1], strides = [1, 1]} : vector<8x2xf32> to vector<8x1xf32>
    %c0_1 = arith.constant 0 : index
    %c0_2 = arith.constant 0 : index
    %2 = memref.load %arg1[%c0_1, %c0_2] : memref<1x2xf32, #tpu.memory_space<smem>>
    %3 = vector.broadcast %2 : f32 to vector<8x1xf32>
    %4 = arith.mulf %1, %3 : vector<8x1xf32>
    %5 = vector.extract_strided_slice %0 {offsets = [0, 1], sizes = [8, 1], strides = [1, 1]} : vector<8x2xf32> to vector<8x1xf32>
    %c0_3 = arith.constant 0 : index
    %c1 = arith.constant 1 : index
    %6 = memref.load %arg1[%c0_3, %c1] : memref<1x2xf32, #tpu.memory_space<smem>>
    %7 = vector.broadcast %6 : f32 to vector<8x1xf32>
    %8 = arith.mulf %5, %7 : vector<8x1xf32>
    %9 = arith.addf %4, %8 : vector<8x1xf32>
    %c0_4 = arith.constant 0 : index
    %10 = memref.load %arg2[%c0_4] : memref<1xf32, #tpu.memory_space<smem>>
    %11 = vector.broadcast %10 : f32 to vector<8x1xf32>
    %12 = arith.addf %9, %11 : vector<8x1xf32>
    %c0_5 = arith.constant 0 : index
    %c0_6 = arith.constant 0 : index
    %13 = vector.load %arg3[%c0_5, %c0_6] : memref<8x1xf32, #tpu.memory_space<vmem>>, vector<8x1xf32>
    tpu.vector_store %arg3[%c0_5, %c0_6], %12 {strides = array<i32>} : memref<8x1xf32, #tpu.memory_space<vmem>>, vector<8x1xf32>,
    return
  }
}

</mosaic_0001>

<llo_original>
// kernel: tpu_custom_call.1
$region0: #{tpu_custom_call.1}
  #allocation0 [shape = 'u32[]', space=smem, size = 0x4, offset = 0x4, fixed_abs, tag = 'smem constant byte address 0x4 - core index']
  #allocation1 [shape = 'u32[144,128]{1,0:T(1,128)}', space=vmem, size = 0x12000, scoped, tag = 'internal scratch']
  #allocation2 [shape = 'f32[1]{0:T(128)S(6)}', space=smem, size = 0x200, scoped, tag = 'scoped memory for tpu_custom_call.1']
  %s0 = inlined_call_operand.vmem [shape: f32[8,2], index: 0, kind: input, shape index: {}]
  %s1 = inlined_call_operand.vmem [shape: f32[1,2], index: 1, kind: input, shape index: {}]
  %s2 = inlined_call_operand.<no memory space> [shape: f32[1], index: 2, kind: input, shape index: {}]
  %s3 = inlined_call_operand.vmem [shape: f32[8,1], index: 3, kind: output, shape index: {}]
  %s4 = sld [smem:[#allocation0]]
  $region26: #{tpu_custom_call.1} parent=0
    _
  %s6 = ssub.s32 1, %s4
  %s7 = scalar_select 0, %s6, %s4
  %8 = sst [smem:[#allocation2]] %s2
  $region1: #{tpu_custom_call.1} parent=0
    #allocation3 [shape = 'u8[512]{0}', space=smem, size = 0x200, scoped, tag = 'input window, operand 1, single buffered']
    #allocation4 [shape = 's32[1]{0}', space=sflag, size = 0x4, scoped, tag = 'scoped memory for tpu_custom_call.1']
    %9 = vsyncpa [#allocation4], 0
    // Predicated region
    $region2: #{tpu_custom_call.1} parent=1 // pred_check
      _
    $region3: #{tpu_custom_call.1} parent=1 // pred_check_branch
      %11 = sbr.rel (0) target = $region5
    $region4: #{tpu_custom_call.1} parent=1 // pred_region
      _
    $region5: #{tpu_custom_call.1} parent=1 // pred_fallthru
      _
    // Predicated region
    $region6: #{tpu_custom_call.1} parent=1 // pred_check
      _
    $region7: #{tpu_custom_call.1} parent=1 // pred_check_branch
      %13 = sbr.rel (0) target = $region9
    $region8: #{tpu_custom_call.1} parent=1 // pred_region
      %s15 = ssub.s32 16, 16
      %16 = vsyncadd [#allocation4], %s15
      %s18 = sshll.u32 %s1, 4
      %s19 = int_to_ptr.vmem [resolvable:$true] %s18
      %21 = dma.vmem_to_smem %s19, 16, [#allocation3], [#allocation4]
    $region9: #{tpu_custom_call.1} parent=1 // pred_fallthru
      _
    // Predicated region
    $region10: #{tpu_custom_call.1} parent=1 // pred_check
      _
    $region11: #{tpu_custom_call.1} parent=1 // pred_check_branch
      %23 = sbr.rel (0) target = $region13
    $region12: #{tpu_custom_call.1} parent=1 // pred_region
      _
    $region13: #{tpu_custom_call.1} parent=1 // pred_fallthru
      _
    // Predicated region
    $region14: #{tpu_custom_call.1} parent=1 // pred_check
      _
    $region15: #{tpu_custom_call.1} parent=1 // pred_check_branch
      %25 = sbr.rel (0) target = $region17
    $region16: #{tpu_custom_call.1} parent=1 // pred_region
      %26 = dma.done [#allocation4], 16
    $region17: #{tpu_custom_call.1} parent=1 // pred_fallthru
      _
    %27 = sfence
    %v28 = vld [vmem:[%s0] sm:$0xff]
    %s29 = sld [smem:[#allocation3]]
    %v30 = vstv %s29
    %v31 = vmul.f32 %v28, %v30
    %s32 = sld [smem:[#allocation3 + $0x1]]
    %v33 = vstv %s32
    %v34 = vmul.f32 %v28, %v33
    %36 = vrot.lane.b32.xlu0 %v34, 127
    %v37 = vpop.permute.xlu0 %36
    %v39 = vadd.f32 %v31, %v37
    %s40 = sld [smem:[#allocation2]]
    %v41 = vstv %s40
    %v42 = vadd.f32 %v39, %v41
    %vm43 = vcmask 7168
    %44 = vst.msk [vmem:[%s3] sm:$0xff] %vm43, %v42
    // Predicated region
    $region18: #{tpu_custom_call.1} parent=1 // pred_check
      _
    $region19: #{tpu_custom_call.1} parent=1 // pred_check_branch
      %46 = sbr.rel (0) target = $region21
    $region20: #{tpu_custom_call.1} parent=1 // pred_region
      _
    $region21: #{tpu_custom_call.1} parent=1 // pred_fallthru
      _
    // Predicated region
    $region22: #{tpu_custom_call.1} parent=1 // pred_check
      _
    $region23: #{tpu_custom_call.1} parent=1 // pred_check_branch
      %48 = sbr.rel (0) target = $region25
    $region24: #{tpu_custom_call.1} parent=1 // pred_region
      _
    $region25: #{tpu_custom_call.1} parent=1 // pred_fallthru
      _
    %49 = vsyncpa [#allocation4], 1

</llo_original>
